<compile_context>
chip_gen: v7x
topology: tpu7x:2x2x1
jax: 0.10.0
libtpu: 0.0.40
codegen_flags: <defaults>
</compile_context>

<pallas_src>
import jax
import jax.numpy as jnp
from jax.experimental import pallas as pl
from jax.experimental.pallas import tpu as pltpu


def _round_up(x: int, m: int) -> int:
    return ((x + m - 1) // m) * m


def _moq_kernel(xt_ref, w1t_ref, b1t_ref, w2ht_ref, b2ht_ref, out_ref):
    # Layer 1 (concat already fused in the wrapper): h^T = ReLU(W1^T @ x^T + b1^T)
    # bf16 operands, f32 accumulation on the MXU; batch on the lane axis.
    h = jnp.dot(w1t_ref[...], xt_ref[...], preferred_element_type=jnp.float32)
    h = jnp.maximum(h + b1t_ref[...], 0.0)                      # (H, tb) f32
    # Layer 2 folded into the heads: q^T = (W2@Wh)^T @ h^T + (b2@Wh + bh)^T
    q = jnp.dot(w2ht_ref[...], h, preferred_element_type=jnp.float32) + b2ht_ref[...]
    out_ref[...] = q.astype(out_ref.dtype)                      # (num_obj, tb)


def _choose_batch_tile(B: int, batch_tile: int) -> int:
    """Lane-dense batch tile: multiple of 128, or the full batch when tiny."""
    if B <= 128:
        return B                       # single block; lane dim == full array dim
    tb = max(128, (batch_tile // 128) * 128)
    # Keep >= ~4 grid steps when the batch allows it so the parallel axis can
    # shard across TensorCores (v7x megacore) and the pipeline has depth.
    quarter = _round_up(-(-B // 4), 128)
    return min(tb, quarter)


def moq_forward(obs, actions, kparams, *, batch_tile=2048, min_pallas_batch=128):
    """Pallas forward. Returns the stacked Q-values of shape (B, num_objectives)."""
    B = obs.shape[0]
    obs_flat = obs.reshape(B, -1)

    w1t, b1t, w2ht, b2ht = (kparams[k] for k in ("w1t", "b1t", "w2ht", "b2ht"))
    hidden, in_dim = w1t.shape
    num_obj = w2ht.shape[0]
    assert obs_flat.shape[1] + actions.shape[1] == in_dim

    # Fused concat (matches torch.cat([obs, actions], dim=1)).
    x = jnp.concatenate([obs_flat, actions], axis=1)

    if B < min_pallas_batch:
        # Tiny-batch latency path: the whole network is a few thousand FLOPs,
        # so pallas_call dispatch would dominate. Plain XLA, same math.
        h = jnp.maximum(x.astype(jnp.float32) @ w1t.T.astype(jnp.float32) + b1t.T, 0.0)
        return h @ w2ht.T + b2ht.T

    # Feature-major bf16 slab: concat + cast + transpose fuse into one copy.
    x_t = x.astype(jnp.bfloat16).T                               # (in_dim, B)

    tb = _choose_batch_tile(B, batch_tile)
    grid = (pl.cdiv(B, tb),)

    flops = 2 * B * (in_dim * hidden + hidden * num_obj)
    bytes_accessed = (x_t.size * 2 + w1t.size * 2                # bf16 activations/W1
                      + (b1t.size + w2ht.size + b2ht.size) * 4   # f32 folded heads
                      + B * num_obj * 4)                         # f32 output

    out_t = pl.pallas_call(
        _moq_kernel,
        out_shape=jax.ShapeDtypeStruct((num_obj, B), jnp.float32),
        grid=grid,
        in_specs=[
            pl.BlockSpec((in_dim, tb), lambda i: (0, i)),        # x^T tile (lane = batch)
            pl.BlockSpec((hidden, in_dim), lambda i: (0, 0)),    # W1^T (resident)
            pl.BlockSpec((hidden, 1), lambda i: (0, 0)),         # b1^T
            pl.BlockSpec((num_obj, hidden), lambda i: (0, 0)),   # (W2@Wh)^T (resident, f32)
            pl.BlockSpec((num_obj, 1), lambda i: (0, 0)),        # (b2@Wh + bh)^T
        ],
        out_specs=pl.BlockSpec((num_obj, tb), lambda i: (0, i)), # lane-dense output
        compiler_params=pltpu.CompilerParams(
            dimension_semantics=("parallel",)),
        cost_estimate=pl.CostEstimate(
            flops=flops, transcendentals=0, bytes_accessed=bytes_accessed),
    )(x_t, w1t, b1t, w2ht, b2ht)

    return out_t.T                                               # (B, num_objectives)


def moq_forward_list(obs, actions, kparams, **kw):
    """Module-identical container: list of (B, 1) arrays, one per objective."""
    q = moq_forward(obs, actions, kparams, **kw)
    return list(jnp.split(q, q.shape[1], axis=1))


def init_params(key, obs_dim, act_dim, hidden, num_objectives):
    """Deterministic synthetic PyTorch-equivalent params. Weights stored (in, out)."""
    input_dim = obs_dim + act_dim
    ks = jax.random.split(key, 6)
    scale = 0.05
    w1 = scale * jax.random.normal(ks[0], (input_dim, hidden), jnp.float32)
    b1 = scale * jax.random.normal(ks[1], (1, hidden), jnp.float32)
    w2 = scale * jax.random.normal(ks[2], (hidden, hidden), jnp.float32)
    b2 = scale * jax.random.normal(ks[3], (1, hidden), jnp.float32)
    wh = scale * jax.random.normal(ks[4], (hidden, num_objectives), jnp.float32)
    bh = scale * jax.random.normal(ks[5], (1, num_objectives), jnp.float32)
    return dict(w1=w1, b1=b1, w2=w2, b2=b2, wh=wh, bh=bh)


def prepare_kernel_params(params):
    """One-time param preprocessing: fold layer-2 into the heads, transpose to
    the feature-major layout, cast layer-1 weights to bf16 (heads stay f32)."""
    w1, b1, w2, b2, wh, bh = (params[k] for k in ("w1", "b1", "w2", "b2", "wh", "bh"))
    w2h = w2 @ wh                       # (H, num_obj), folded in f32 (exact: no activation)
    b2h = b2 @ wh + bh                  # (1, num_obj)
    return dict(
        w1t=w1.T.astype(jnp.bfloat16),  # (H, in_dim)
        b1t=b1.T.astype(jnp.float32),   # (H, 1)
        w2ht=w2h.T.astype(jnp.float32), # (num_obj, H) -- kept f32, only 128x4
        b2ht=b2h.T.astype(jnp.float32), # (num_obj, 1)
    )


def moq_forward_ref(obs, actions, params):
    """Pure-JAX f32 reference following the PyTorch module exactly (unfolded)."""
    B = obs.shape[0]
    x = jnp.concatenate([obs.reshape(B, -1), actions], axis=1).astype(jnp.float32)
    h1 = jnp.maximum(x @ params["w1"] + params["b1"], 0.0)
    feat = h1 @ params["w2"] + params["b2"]
    q = feat @ params["wh"] + params["bh"]
    return q  # stacked (B, num_objectives)


if __name__ == "__main__":
    # Shapes consistent with the module: Box obs (4, 4), Box actions (4,),
    # net_arch=[128, 128], 4 objectives.
    OBS_SHAPE = (4, 4)      # obs_dim = 16
    ACT_DIM = 4
    HIDDEN = 128
    NUM_OBJ = 4
    OBS_DIM = 16

    key = jax.random.PRNGKey(0)
    k_par, k_a, k_b = jax.random.split(key, 3)
    params = init_params(k_par, OBS_DIM, ACT_DIM, HIDDEN, NUM_OBJ)
    kparams = prepare_kernel_params(params)

    # --- Case 1: module-sized example (B=2); force the Pallas path. ---
    B = 2
    ko, ka = jax.random.split(k_a)
    obs = jax.random.normal(ko, (B,) + OBS_SHAPE, jnp.float32)
    actions = jax.random.normal(ka, (B, ACT_DIM), jnp.float32)

    q = jax.block_until_ready(moq_forward(obs, actions, kparams, min_pallas_batch=0))
    assert q.shape == (B, NUM_OBJ)
    q_ref = moq_forward_ref(obs, actions, params)
    assert jnp.allclose(q, q_ref, atol=2e-2, rtol=2e-2), (
        f"max abs err {jnp.max(jnp.abs(q - q_ref))}")

    # Module-identical list-of-(B,1) container.
    q_list = moq_forward_list(obs, actions, kparams, min_pallas_batch=0)
    q_list = [jax.block_until_ready(v) for v in q_list]
    assert len(q_list) == NUM_OBJ and all(v.shape == (B, 1) for v in q_list)
    for i, v in enumerate(q_list):
        assert jnp.allclose(v, q_ref[:, i:i + 1], atol=2e-2, rtol=2e-2)

    # --- Case 2: larger ragged batch exercising a multi-step lane-dense grid
    #     (tb=256 -> 4 grid steps, last block ragged, no wrapper padding). ---
    B2 = 777
    ko2, ka2 = jax.random.split(k_b)
    obs2 = jax.random.normal(ko2, (B2,) + OBS_SHAPE, jnp.float32)
    act2 = jax.random.normal(ka2, (B2, ACT_DIM), jnp.float32)

    q2 = jax.block_until_ready(moq_forward(obs2, act2, kparams, batch_tile=256))
    assert q2.shape == (B2, NUM_OBJ)
    q2_ref = moq_forward_ref(obs2, act2, params)
    assert jnp.allclose(q2, q2_ref, atol=2e-2, rtol=2e-2), (
        f"max abs err {jnp.max(jnp.abs(q2 - q2_ref))}")

    print("KERNEL_OK")
</pallas_src>

<mosaic_0001>
module attributes {stable_mosaic.version = 11 : i64} {
  func.func @_moq_kernel(%arg0: i32, %arg1: memref<20x2xbf16, #tpu.memory_space<vmem>>, %arg2: memref<128x20xbf16, #tpu.memory_space<vmem>>, %arg3: memref<128x1xf32, #tpu.memory_space<vmem>>, %arg4: memref<4x128xf32, #tpu.memory_space<vmem>>, %arg5: memref<4x1xf32, #tpu.memory_space<vmem>>, %arg6: memref<4x2xf32, #tpu.memory_space<vmem>>) attributes {dimension_semantics = [#tpu.dimension_semantics<parallel>], iteration_bounds = array<i64: 1>, scalar_prefetch = 0 : i64, scratch_operands = 0 : i64, tpu.core_type = #tpu.core_type<tc>, window_params = [{transform_indices = @transform_0, window_bounds = array<i64: 20, 2>}, {pipeline_mode = #tpu.pipeline_mode<synchronous>, transform_indices = @transform_1, window_bounds = array<i64: 128, 20>}, {pipeline_mode = #tpu.pipeline_mode<synchronous>, transform_indices = @transform_2, window_bounds = array<i64: 128, 1>}, {pipeline_mode = #tpu.pipeline_mode<synchronous>, transform_indices = @transform_3, window_bounds = array<i64: 4, 128>}, {pipeline_mode = #tpu.pipeline_mode<synchronous>, transform_indices = @transform_4, window_bounds = array<i64: 4, 1>}, {transform_indices = @transform_5, window_bounds = array<i64: 4, 2>}]} {
    %c0 = arith.constant 0 : index
    %c0_0 = arith.constant 0 : index
    %0 = vector.load %arg2[%c0, %c0_0] : memref<128x20xbf16, #tpu.memory_space<vmem>>, vector<128x20xbf16>
    %c0_1 = arith.constant 0 : index
    %c0_2 = arith.constant 0 : index
    %1 = vector.load %arg1[%c0_1, %c0_2] : memref<20x2xbf16, #tpu.memory_space<vmem>>, vector<20x2xbf16>
    %cst = arith.constant dense<0.000000e+00> : vector<128x2xf32>
    %2 = tpu.matmul %0, %1, %cst {dimension_numbers = #tpu.dot_dimension_numbers<[1], [0], [0], [1], [0, 0, 1, 1], [], []>} : vector<128x20xbf16>, vector<20x2xbf16>, vector<128x2xf32> -> vector<128x2xf32>
    %c0_3 = arith.constant 0 : index
    %c0_4 = arith.constant 0 : index
    %3 = vector.load %arg3[%c0_3, %c0_4] : memref<128x1xf32, #tpu.memory_space<vmem>>, vector<128x1xf32>
    %4 = vector.broadcast %3 : vector<128x1xf32> to vector<128x2xf32>
    %5 = arith.addf %2, %4 : vector<128x2xf32>
    %cst_5 = arith.constant 0.000000e+00 : f32
    %6 = vector.broadcast %cst_5 : f32 to vector<128x2xf32>
    %7 = arith.maximumf %5, %6 : vector<128x2xf32>
    %c0_6 = arith.constant 0 : index
    %c0_7 = arith.constant 0 : index
    %8 = vector.load %arg4[%c0_6, %c0_7] : memref<4x128xf32, #tpu.memory_space<vmem>>, vector<4x128xf32>
    %cst_8 = arith.constant dense<0.000000e+00> : vector<4x2xf32>
    %9 = tpu.matmul %8, %7, %cst_8 {dimension_numbers = #tpu.dot_dimension_numbers<[1], [0], [0], [1], [0, 0, 1, 1], [], []>} : vector<4x128xf32>, vector<128x2xf32>, vector<4x2xf32> -> vector<4x2xf32>
    %c0_9 = arith.constant 0 : index
    %c0_10 = arith.constant 0 : index
    %10 = vector.load %arg5[%c0_9, %c0_10] : memref<4x1xf32, #tpu.memory_space<vmem>>, vector<4x1xf32>
    %11 = vector.broadcast %10 : vector<4x1xf32> to vector<4x2xf32>
    %12 = arith.addf %9, %11 : vector<4x2xf32>
    %c0_11 = arith.constant 0 : index
    %c0_12 = arith.constant 0 : index
    %13 = vector.load %arg6[%c0_11, %c0_12] : memref<4x2xf32, #tpu.memory_space<vmem>>, vector<4x2xf32>
    tpu.vector_store %arg6[%c0_11, %c0_12], %12 {strides = array<i32>} : memref<4x2xf32, #tpu.memory_space<vmem>>, vector<4x2xf32>,
    return
  }
  func.func @transform_0(%arg0: i32) -> (i32, i32) {
    %c0_i32 = arith.constant 0 : i32
    %c0_i32_0 = arith.constant 0 : i32
    return %c0_i32, %arg0 : i32, i32
  }
  func.func @transform_1(%arg0: i32) -> (i32, i32) {
    %c0_i32 = arith.constant 0 : i32
    %c0_i32_0 = arith.constant 0 : i32
    %c0_i32_1 = arith.constant 0 : i32
    return %c0_i32, %c0_i32_0 : i32, i32
  }
  func.func @transform_2(%arg0: i32) -> (i32, i32) {
    %c0_i32 = arith.constant 0 : i32
    %c0_i32_0 = arith.constant 0 : i32
    %c0_i32_1 = arith.constant 0 : i32
    return %c0_i32, %c0_i32_0 : i32, i32
  }
  func.func @transform_3(%arg0: i32) -> (i32, i32) {
    %c0_i32 = arith.constant 0 : i32
    %c0_i32_0 = arith.constant 0 : i32
    %c0_i32_1 = arith.constant 0 : i32
    return %c0_i32, %c0_i32_0 : i32, i32
  }
  func.func @transform_4(%arg0: i32) -> (i32, i32) {
    %c0_i32 = arith.constant 0 : i32
    %c0_i32_0 = arith.constant 0 : i32
    %c0_i32_1 = arith.constant 0 : i32
    return %c0_i32, %c0_i32_0 : i32, i32
  }
  func.func @transform_5(%arg0: i32) -> (i32, i32) {
    %c0_i32 = arith.constant 0 : i32
    %c0_i32_0 = arith.constant 0 : i32
    return %c0_i32, %arg0 : i32, i32
  }
}

</mosaic_0001>

<llo_original>
// kernel: tpu_custom_call.1
$region0: #{tpu_custom_call.1}
  #allocation0 [shape = 'u32[]', space=smem, size = 0x4, offset = 0x4, fixed_abs, tag = 'smem constant byte address 0x4 - core index']
  #allocation1 [shape = 'u32[144,128]{1,0:T(1,128)}', space=vmem, size = 0x12000, scoped, tag = 'internal scratch']
  %s0 = inlined_call_operand.vmem [shape: bf16[20,2], index: 0, kind: input, shape index: {}]
  %s1 = inlined_call_operand.vmem [shape: bf16[128,20], index: 1, kind: input, shape index: {}]
  %s2 = inlined_call_operand.vmem [shape: f32[128,1], index: 2, kind: input, shape index: {}]
  %s3 = inlined_call_operand.vmem [shape: f32[4,128], index: 3, kind: input, shape index: {}]
  %s4 = inlined_call_operand.vmem [shape: f32[4,1], index: 4, kind: input, shape index: {}]
  %s5 = inlined_call_operand.vmem [shape: f32[4,2], index: 5, kind: output, shape index: {}]
  %s6 = sld [smem:[#allocation0]]
  $region30: #{tpu_custom_call.1} parent=0
    _
  %s8 = ssub.s32 1, %s6
  %s9 = scalar_select 0, %s8, %s6
  // Predicated region
  $region2: #{tpu_custom_call.1} parent=0 // pred_check
    _
  $region3: #{tpu_custom_call.1} parent=0 // pred_check_branch
    %11 = sbr.rel (0) target = $region5
  $region4: #{tpu_custom_call.1} parent=0 // pred_region
    _
  $region5: #{tpu_custom_call.1} parent=0 // pred_fallthru
    _
  // Predicated region
  $region6: #{tpu_custom_call.1} parent=0 // pred_check
    _
  $region7: #{tpu_custom_call.1} parent=0 // pred_check_branch
    %13 = sbr.rel (0) target = $region9
  $region8: #{tpu_custom_call.1} parent=0 // pred_region
    _
  $region9: #{tpu_custom_call.1} parent=0 // pred_fallthru
    _
  // Predicated region
  $region10: #{tpu_custom_call.1} parent=0 // pred_check
    _
  $region11: #{tpu_custom_call.1} parent=0 // pred_check_branch
    %15 = sbr.rel (0) target = $region13
  $region12: #{tpu_custom_call.1} parent=0 // pred_region
    _
  $region13: #{tpu_custom_call.1} parent=0 // pred_fallthru
    _
  // Predicated region
  $region14: #{tpu_custom_call.1} parent=0 // pred_check
    _
  $region15: #{tpu_custom_call.1} parent=0 // pred_check_branch
    %17 = sbr.rel (0) target = $region17
  $region16: #{tpu_custom_call.1} parent=0 // pred_region
    _
  $region17: #{tpu_custom_call.1} parent=0 // pred_fallthru
    _
  // Predicated region
  $region18: #{tpu_custom_call.1} parent=0 // pred_check
    _
  $region19: #{tpu_custom_call.1} parent=0 // pred_check_branch
    %19 = sbr.rel (0) target = $region21
  $region20: #{tpu_custom_call.1} parent=0 // pred_region
    _
  $region21: #{tpu_custom_call.1} parent=0 // pred_fallthru
    _
  %v21 = vld [vmem:[%s1] sm:$0xf]
  %v22 = vld [vmem:[%s1 + $0x4] sm:$0xf]
  %v23 = vld [vmem:[%s1 + $0x8] sm:$0xf]
  %v24 = vld [vmem:[%s1 + $0xc] sm:$0xf]
  %v25 = vld [vmem:[%s1 + $0x10] sm:$0xf]
  %v26 = vld [vmem:[%s1 + $0x14] sm:$0xf]
  %v27 = vld [vmem:[%s1 + $0x18] sm:$0xf]
  %v28 = vld [vmem:[%s1 + $0x1c] sm:$0xf]
  %v29 = vld [vmem:[%s1 + $0x20] sm:$0xf]
  %v30 = vld [vmem:[%s1 + $0x24] sm:$0xf]
  %v31 = vld [vmem:[%s1 + $0x28] sm:$0xf]
  %v32 = vld [vmem:[%s1 + $0x2c] sm:$0xf]
  %v33 = vld [vmem:[%s1 + $0x30] sm:$0xf]
  %v34 = vld [vmem:[%s1 + $0x34] sm:$0xf]
  %v35 = vld [vmem:[%s1 + $0x38] sm:$0xf]
  %v36 = vld [vmem:[%s1 + $0x3c] sm:$0xf]
  %v37 = vld [vmem:[%s0] sm:$0xf]
  %v38 = vld [vmem:[%s0 + $0x4] sm:$0xf]
  %v39 = vld [vmem:[%s0 + $0x8] sm:$0x3]
  %v40 = vld [vmem:[%s2] sm:$0xff]
  %v41 = vld [vmem:[%s2 + $0x8] sm:$0xff]
  %v42 = vld [vmem:[%s2 + $0x10] sm:$0xff]
  %v43 = vld [vmem:[%s2 + $0x18] sm:$0xff]
  %v44 = vld [vmem:[%s2 + $0x20] sm:$0xff]
  %v45 = vld [vmem:[%s2 + $0x28] sm:$0xff]
  %v46 = vld [vmem:[%s2 + $0x30] sm:$0xff]
  %v47 = vld [vmem:[%s2 + $0x38] sm:$0xff]
  %v48 = vld [vmem:[%s2 + $0x40] sm:$0xff]
  %v49 = vld [vmem:[%s2 + $0x48] sm:$0xff]
  %v50 = vld [vmem:[%s2 + $0x50] sm:$0xff]
  %v51 = vld [vmem:[%s2 + $0x58] sm:$0xff]
  %v52 = vld [vmem:[%s2 + $0x60] sm:$0xff]
  %v53 = vld [vmem:[%s2 + $0x68] sm:$0xff]
  %v54 = vld [vmem:[%s2 + $0x70] sm:$0xff]
  %v55 = vld [vmem:[%s2 + $0x78] sm:$0xff]
  %57 = vset.pattern.permute.xlu0 0
  %58 = vperm.xlu0 %57, %v40
  %v59 = vpop.permute.xlu0 %58
  %62 = vset.pattern.permute.xlu0 0
  %63 = vperm.xlu0 %62, %v41
  %v64 = vpop.permute.xlu0 %63
  %67 = vset.pattern.permute.xlu0 0
  %68 = vperm.xlu0 %67, %v42
  %v69 = vpop.permute.xlu0 %68
  %72 = vset.pattern.permute.xlu0 0
  %73 = vperm.xlu0 %72, %v43
  %v74 = vpop.permute.xlu0 %73
  %77 = vset.pattern.permute.xlu0 0
  %78 = vperm.xlu0 %77, %v44
  %v79 = vpop.permute.xlu0 %78
  %82 = vset.pattern.permute.xlu0 0
  %83 = vperm.xlu0 %82, %v45
  %v84 = vpop.permute.xlu0 %83
  %87 = vset.pattern.permute.xlu0 0
  %88 = vperm.xlu0 %87, %v46
  %v89 = vpop.permute.xlu0 %88
  %92 = vset.pattern.permute.xlu0 0
  %93 = vperm.xlu0 %92, %v47
  %v94 = vpop.permute.xlu0 %93
  %97 = vset.pattern.permute.xlu0 0
  %98 = vperm.xlu0 %97, %v48
  %v99 = vpop.permute.xlu0 %98
  %102 = vset.pattern.permute.xlu0 0
  %103 = vperm.xlu0 %102, %v49
  %v104 = vpop.permute.xlu0 %103
  %107 = vset.pattern.permute.xlu0 0
  %108 = vperm.xlu0 %107, %v50
  %v109 = vpop.permute.xlu0 %108
  %112 = vset.pattern.permute.xlu0 0
  %113 = vperm.xlu0 %112, %v51
  %v114 = vpop.permute.xlu0 %113
  %117 = vset.pattern.permute.xlu0 0
  %118 = vperm.xlu0 %117, %v52
  %v119 = vpop.permute.xlu0 %118
  %122 = vset.pattern.permute.xlu0 0
  %123 = vperm.xlu0 %122, %v53
  %v124 = vpop.permute.xlu0 %123
  %127 = vset.pattern.permute.xlu0 0
  %128 = vperm.xlu0 %127, %v54
  %v129 = vpop.permute.xlu0 %128
  %132 = vset.pattern.permute.xlu0 0
  %133 = vperm.xlu0 %132, %v55
  %v134 = vpop.permute.xlu0 %133
  %v152 = vunpack.c.l.b16 %v21
  %v153 = vunpack.c.l.b16 %v22
  %v154 = vunpack.c.l.b16 %v23
  %v155 = vunpack.c.l.b16 %v24
  %v156 = vunpack.c.l.b16 %v25
  %v157 = vunpack.c.l.b16 %v26
  %v158 = vunpack.c.l.b16 %v27
  %v159 = vunpack.c.l.b16 %v28
  %v160 = vunpack.c.l.b16 %v29
  %v161 = vunpack.c.l.b16 %v30
  %v162 = vunpack.c.l.b16 %v31
  %v163 = vunpack.c.l.b16 %v32
  %v164 = vunpack.c.l.b16 %v33
  %v165 = vunpack.c.l.b16 %v34
  %v166 = vunpack.c.l.b16 %v35
  %v167 = vunpack.c.l.b16 %v36
  %v168 = vpack.c.b16 %v153, %v152
  %v169 = vpack.c.b16 %v155, %v154
  %v170 = vpack.c.b16 %v157, %v156
  %v171 = vpack.c.b16 %v159, %v158
  %v172 = vpack.c.b16 %v161, %v160
  %v173 = vpack.c.b16 %v163, %v162
  %v174 = vpack.c.b16 %v165, %v164
  %v175 = vpack.c.b16 %v167, %v166
  %v179 = vunpack.c.l.b16 %v37
  %v180 = vunpack.c.l.b16 %v38
  %v181 = vunpack.c.l.b16 %v39
  %v182 = vpack.c.b16 %v180, %v179
  %v183 = vpack.c.b16 %v181, %v181
  %vm185 = vcmask 162816
  %v187 = vsel %vm185, %v168, 0
  %v190 = vsel %vm185, %v169, 0
  %v193 = vsel %vm185, %v170, 0
  %v196 = vsel %vm185, %v171, 0
  %v199 = vsel %vm185, %v172, 0
  %v202 = vsel %vm185, %v173, 0
  %v205 = vsel %vm185, %v174, 0
  %v208 = vsel %vm185, %v175, 0
  %vm210 = vcmask 1041408
  %v212 = vsel %vm210, %v183, 0
  %214 = vmatprep.subr.bf16.mxu0 0
  %215 = vmatpush1.bf16.msra.mxu0 %v182
  %216 = vmatprep.subr.bf16.mxu0 0
  %217 = vmatpush1.bf16.msra.mxu0 %v212
  %218 = vmatprep.subr.bf16.mxu0 0
  %219 = vmatpush1.bf16.msra.mxu0 0
  %220 = vmatprep.subr.bf16.mxu0 0
  %221 = vmatpush1.bf16.msra.mxu0 0
  %222 = vmatprep.subr.bf16.mxu0 0
  %223 = vmatpush1.bf16.msra.mxu0 0
  %224 = vmatprep.subr.bf16.mxu0 0
  %225 = vmatpush1.bf16.msra.mxu0 0
  %226 = vmatprep.subr.bf16.mxu0 0
  %227 = vmatpush1.bf16.msra.mxu0 0
  %228 = vmatprep.subr.bf16.mxu0 0
  %229 = vmatpush1.bf16.msra.mxu0 0
  %230 = vmatprep.subr.bf16.mxu0 0
  %231 = vmatpush1.bf16.msra.mxu0 0
  %232 = vmatprep.subr.bf16.mxu0 0
  %233 = vmatpush1.bf16.msra.mxu0 0
  %234 = vmatprep.subr.bf16.mxu0 0
  %235 = vmatpush1.bf16.msra.mxu0 0
  %236 = vmatprep.subr.bf16.mxu0 0
  %237 = vmatpush1.bf16.msra.mxu0 0
  %238 = vmatprep.subr.bf16.mxu0 0
  %239 = vmatpush1.bf16.msra.mxu0 0
  %240 = vmatprep.subr.bf16.mxu0 0
  %241 = vmatpush1.bf16.msra.mxu0 0
  %242 = vmatprep.subr.bf16.mxu0 0
  %243 = vmatpush1.bf16.msra.mxu0 0
  %244 = vmatprep.subr.bf16.mxu0 0
  %245 = vmatpush1.bf16.msra.mxu0 0
  %246 = vmatprep.mubr.bf16.mxu0 0
  %247 = vmatmul.mubr.bf16.gmra.mrb[0].mxu0 %v187
  %v248 = vpop.f32.mrb[0].mxu0
  %v249 = vadd.f32 %v59, %v248
  %v250 = vpop.f32.mrb[0].mxu0
  %v251 = vpop.f32.mrb[0].mxu0
  %v252 = vadd.f32 %v64, %v251
  %v253 = vpop.f32.mrb[0].mxu0
  %254 = vmatprep.mubr.bf16.mxu0 0
  %255 = vmatmul.mubr.bf16.gmra.mrb[0].mxu0 %v190
  %v256 = vpop.f32.mrb[0].mxu0
  %v257 = vadd.f32 %v69, %v256
  %v258 = vpop.f32.mrb[0].mxu0
  %v259 = vpop.f32.mrb[0].mxu0
  %v260 = vadd.f32 %v74, %v259
  %v261 = vpop.f32.mrb[0].mxu0
  %262 = vmatprep.mubr.bf16.mxu0 0
  %263 = vmatmul.mubr.bf16.gmra.mrb[0].mxu0 %v193
  %v264 = vpop.f32.mrb[0].mxu0
  %v265 = vadd.f32 %v79, %v264
  %v266 = vpop.f32.mrb[0].mxu0
  %v267 = vpop.f32.mrb[0].mxu0
  %v268 = vadd.f32 %v84, %v267
  %v269 = vpop.f32.mrb[0].mxu0
  %270 = vmatprep.mubr.bf16.mxu0 0
  %271 = vmatmul.mubr.bf16.gmra.mrb[0].mxu0 %v196
  %v272 = vpop.f32.mrb[0].mxu0
  %v273 = vadd.f32 %v89, %v272
  %v274 = vpop.f32.mrb[0].mxu0
  %v275 = vpop.f32.mrb[0].mxu0
  %v276 = vadd.f32 %v94, %v275
  %v277 = vpop.f32.mrb[0].mxu0
  %278 = vmatprep.mubr.bf16.mxu0 0
  %279 = vmatmul.mubr.bf16.gmra.mrb[0].mxu0 %v199
  %v280 = vpop.f32.mrb[0].mxu0
  %v281 = vadd.f32 %v99, %v280
  %v282 = vpop.f32.mrb[0].mxu0
  %v283 = vpop.f32.mrb[0].mxu0
  %v284 = vadd.f32 %v104, %v283
  %v285 = vpop.f32.mrb[0].mxu0
  %286 = vmatprep.mubr.bf16.mxu0 0
  %287 = vmatmul.mubr.bf16.gmra.mrb[0].mxu0 %v202
  %v288 = vpop.f32.mrb[0].mxu0
  %v289 = vadd.f32 %v109, %v288
  %v290 = vpop.f32.mrb[0].mxu0
  %v291 = vpop.f32.mrb[0].mxu0
  %v292 = vadd.f32 %v114, %v291
  %v293 = vpop.f32.mrb[0].mxu0
  %294 = vmatprep.mubr.bf16.mxu0 0
  %295 = vmatmul.mubr.bf16.gmra.mrb[0].mxu0 %v205
  %v296 = vpop.f32.mrb[0].mxu0
  %v297 = vadd.f32 %v119, %v296
  %v298 = vpop.f32.mrb[0].mxu0
  %v299 = vpop.f32.mrb[0].mxu0
  %v300 = vadd.f32 %v124, %v299
  %v301 = vpop.f32.mrb[0].mxu0
  %302 = vmatprep.mubr.bf16.mxu0 0
  %303 = vmatmul.mubr.bf16.gmra.mrb[0].mxu0 %v208
  %v304 = vpop.f32.mrb[0].mxu0
  %v305 = vadd.f32 %v129, %v304
  %v306 = vpop.f32.mrb[0].mxu0
  %v307 = vpop.f32.mrb[0].mxu0
  %v308 = vadd.f32 %v134, %v307
  %v309 = vpop.f32.mrb[0].mxu0
  %310 = vdwg.mxu0
  %v311 = vmax.f32 %v249, 0.0
  %v312 = vmax.f32 %v252, 0.0
  %v313 = vmax.f32 %v257, 0.0
  %v314 = vmax.f32 %v260, 0.0
  %v315 = vmax.f32 %v265, 0.0
  %v316 = vmax.f32 %v268, 0.0
  %v317 = vmax.f32 %v273, 0.0
  %v318 = vmax.f32 %v276, 0.0
  %v319 = vmax.f32 %v281, 0.0
  %v320 = vmax.f32 %v284, 0.0
  %v321 = vmax.f32 %v289, 0.0
  %v322 = vmax.f32 %v292, 0.0
  %v323 = vmax.f32 %v297, 0.0
  %v324 = vmax.f32 %v300, 0.0
  %v325 = vmax.f32 %v305, 0.0
  %v326 = vmax.f32 %v308, 0.0
  %v327 = vld [vmem:[%s3] sm:$0xf]
  %v328 = vld [vmem:[%s4] sm:$0xf]
  %330 = vset.pattern.permute.xlu0 0
  %331 = vperm.xlu0 %330, %v328
  %v332 = vpop.permute.xlu0 %331
  %334 = vmatprep.subr.mxu0 0.0
  %335 = vmatpush1.msra.mxu0 %v311
  %336 = vmatprep.subr.mxu0 0.0
  %337 = vmatpush1.msra.mxu0 %v312
  %338 = vmatprep.subr.mxu0 0.0
  %339 = vmatpush1.msra.mxu0 %v313
  %340 = vmatprep.subr.mxu0 0.0
  %341 = vmatpush1.msra.mxu0 %v314
  %342 = vmatprep.subr.mxu0 0.0
  %343 = vmatpush1.msra.mxu0 %v315
  %344 = vmatprep.subr.mxu0 0.0
  %345 = vmatpush1.msra.mxu0 %v316
  %346 = vmatprep.subr.mxu0 0.0
  %347 = vmatpush1.msra.mxu0 %v317
  %348 = vmatprep.subr.mxu0 0.0
  %349 = vmatpush1.msra.mxu0 %v318
  %350 = vmatprep.subr.mxu0 0.0
  %351 = vmatpush1.msra.mxu0 %v319
  %352 = vmatprep.subr.mxu0 0.0
  %353 = vmatpush1.msra.mxu0 %v320
  %354 = vmatprep.subr.mxu0 0.0
  %355 = vmatpush1.msra.mxu0 %v321
  %356 = vmatprep.subr.mxu0 0.0
  %357 = vmatpush1.msra.mxu0 %v322
  %358 = vmatprep.subr.mxu0 0.0
  %359 = vmatpush1.msra.mxu0 %v323
  %360 = vmatprep.subr.mxu0 0.0
  %361 = vmatpush1.msra.mxu0 %v324
  %362 = vmatprep.subr.mxu0 0.0
  %363 = vmatpush1.msra.mxu0 %v325
  %364 = vmatprep.subr.mxu0 0.0
  %365 = vmatpush1.msra.mxu0 %v326
  %366 = vmatprep.subr.mxu0 0.0
  %367 = vmatpush1.msra.mxu0 0.0
  %368 = vmatprep.subr.mxu0 0.0
  %369 = vmatpush1.msra.mxu0 0.0
  %370 = vmatprep.subr.mxu0 0.0
  %371 = vmatpush1.msra.mxu0 0.0
  %372 = vmatprep.subr.mxu0 0.0
  %373 = vmatpush1.msra.mxu0 0.0
  %374 = vmatprep.subr.mxu0 0.0
  %375 = vmatpush1.msra.mxu0 0.0
  %376 = vmatprep.subr.mxu0 0.0
  %377 = vmatpush1.msra.mxu0 0.0
  %378 = vmatprep.subr.mxu0 0.0
  %379 = vmatpush1.msra.mxu0 0.0
  %380 = vmatprep.subr.mxu0 0.0
  %381 = vmatpush1.msra.mxu0 0.0
  %382 = vmatprep.subr.mxu0 0.0
  %383 = vmatpush1.msra.mxu0 0.0
  %384 = vmatprep.subr.mxu0 0.0
  %385 = vmatpush1.msra.mxu0 0.0
  %386 = vmatprep.subr.mxu0 0.0
  %387 = vmatpush1.msra.mxu0 0.0
  %388 = vmatprep.subr.mxu0 0.0
  %389 = vmatpush1.msra.mxu0 0.0
  %390 = vmatprep.subr.mxu0 0.0
  %391 = vmatpush1.msra.mxu0 0.0
  %392 = vmatprep.subr.mxu0 0.0
  %393 = vmatpush1.msra.mxu0 0.0
  %394 = vmatprep.subr.mxu0 0.0
  %395 = vmatpush1.msra.mxu0 0.0
  %396 = vmatprep.subr.mxu0 0.0
  %397 = vmatpush1.msra.mxu0 0.0
  %398 = vmatprep.mubr.f32.mxu0 0.0
  %399 = vmatmul.mubr.f32.gmra.mrb[0].mxu0 %v327
  %v400 = vpop.f32.mrb[0].mxu0
  %v401 = vadd.f32 %v332, %v400
  %v402 = vpop.f32.mrb[0].mxu0
  %403 = vdwg.mxu0
  %vm404 = vcmask 11264
  %405 = vst.msk [vmem:[%s5] sm:$0xf] %vm404, %v401
  // Predicated region
  $region22: #{tpu_custom_call.1} parent=0 // pred_check
    _
  $region23: #{tpu_custom_call.1} parent=0 // pred_check_branch
    %407 = sbr.rel (0) target = $region25
  $region24: #{tpu_custom_call.1} parent=0 // pred_region
    _
  $region25: #{tpu_custom_call.1} parent=0 // pred_fallthru
    _
  // Predicated region
  $region26: #{tpu_custom_call.1} parent=0 // pred_check
    _
  $region27: #{tpu_custom_call.1} parent=0 // pred_check_branch
    %409 = sbr.rel (0) target = $region29
  $region28: #{tpu_custom_call.1} parent=0 // pred_region
    _
  $region29: #{tpu_custom_call.1} parent=0 // pred_fallthru
    _

</llo_original>
